<compile_context>
chip_gen: v7x
topology: tpu7x:2x2x1
jax: 0.10.0
libtpu: 0.0.40
codegen_flags: <defaults>
</compile_context>

<pallas_src>
import jax
import jax.numpy as jnp
from jax.experimental import pallas as pl
from jax.experimental.pallas import tpu as pltpu


def _conv1x1_hardswish_kernel(x_ref, w_ref, o_ref):
    # x_ref: (N*Cin, L)   w_ref: (Cout, Cin+1)  [last column = bias]   o_ref: (N*Cout, L)
    x = x_ref[...]
    w = w_ref[...]

    n_cin, L = x.shape
    cout, cin_p1 = w.shape
    cin = cin_p1 - 1
    n = n_cin // cin

    for b in range(n):                                   # static, unrolled (N small)
        # seed accumulator with the bias column (lane broadcast of a resident tile)
        v1 = jnp.broadcast_to(w[:, cin:cin + 1], (cout, L))
        for c in range(cin):                             # static, unrolled (Cin = 3)
            row = b * cin + c
            # (Cout,1) * (1,L) -> (Cout,L) VPU multiply-add, no MXU
            v1 = v1 + w[:, c:c + 1] * x[row:row + 1, :]

        # hardswish-style tail: relu then relu6 == single clamp to [0, 6]
        v4 = jnp.clip(v1 + 3.0, 0.0, 6.0)
        o_ref[b * cout:(b + 1) * cout, :] = (v1 * v4 * (1.0 / 6.0)).astype(o_ref.dtype)


def conv1x1_pad1_hardswish(x_nchw, weight, bias):
    """x_nchw: (N, Cin, H, W); weight: (Cout, Cin, 1, 1); bias: (Cout,)"""
    N, Cin, H, W = x_nchw.shape
    Cout = weight.shape[0]
    Hp, Wp = H + 2, W + 2          # padding=1 with a 1x1 kernel grows spatial dims by 2
    L = Hp * Wp

    # Zero-pad spatially; border pixels come out as hardswish(bias) automatically.
    # allow_input_fusion below lets XLA fuse this pad (+contiguous reshape) straight
    # into the pallas_call operand instead of a separate padded HBM copy.
    x_pad = jnp.pad(x_nchw, ((0, 0), (0, 0), (1, 1), (1, 1)))
    x_flat = x_pad.reshape(N * Cin, L)                   # contiguous reshape, no transpose

    # Weight tile with bias folded in as an extra column: (Cout, Cin+1)
    w_aug = jnp.concatenate(
        [weight.reshape(Cout, Cin), bias.reshape(Cout, 1)], axis=1
    ).astype(jnp.float32)

    out_flat = pl.pallas_call(
        _conv1x1_hardswish_kernel,
        out_shape=jax.ShapeDtypeStruct((N * Cout, L), jnp.float32),
        in_specs=[
            pl.BlockSpec((N * Cin, L), lambda: (0, 0)),      # whole array, single block
            pl.BlockSpec((Cout, Cin + 1), lambda: (0, 0)),
        ],
        out_specs=pl.BlockSpec((N * Cout, L), lambda: (0, 0)),
        compiler_params=pltpu.CompilerParams(
            allow_input_fusion=[True, True],
        ),
    )(x_flat, w_aug)

    # TODO(synk): for large N, reinstate a batch grid (several batches per step,
    # dimension_semantics=("parallel",)) so v7x can shard across its 2 TensorCores.
    return out_flat.reshape(N, Cout, Hp, Wp)             # contiguous reshape, still NCHW


def reference(x_nchw, weight, bias):
    """Pure-JAX reference of the PyTorch forward."""
    x_pad = jnp.pad(x_nchw, ((0, 0), (0, 0), (1, 1), (1, 1)))
    v1 = jnp.einsum("nchw,oc->nohw", x_pad,
                    weight.reshape(weight.shape[0], weight.shape[1]))
    v1 = v1 + bias.reshape(1, -1, 1, 1)
    v2 = v1 + 3.0
    v3 = jnp.maximum(v2, 0.0)
    v4 = jnp.clip(v3, 0.0, 6.0)
    return v1 * v4 / 6.0


if __name__ == "__main__":
    key = jax.random.PRNGKey(0)
    kx, kw, kb = jax.random.split(key, 3)

    # Small shapes consistent with the module: N=2, Cin=3, Cout=8, H=W=16
    N, Cin, Cout, H, W = 2, 3, 8, 16, 16
    x = jax.random.normal(kx, (N, Cin, H, W), dtype=jnp.float32)

    # Deterministic synthetic Conv2d(3, 8, 1) parameters
    fan_in = Cin * 1 * 1
    bound = 1.0 / (fan_in ** 0.5)
    weight = jax.random.uniform(kw, (Cout, Cin, 1, 1), jnp.float32, -bound, bound)
    bias = jax.random.uniform(kb, (Cout,), jnp.float32, -bound, bound)

    fwd = jax.jit(conv1x1_pad1_hardswish)
    out = fwd(x, weight, bias)
    out = jax.block_until_ready(out)

    ref = reference(x, weight, bias)
    assert out.shape == (N, Cout, H + 2, W + 2), out.shape
    assert jnp.allclose(out, ref, atol=1e-5, rtol=1e-5), float(jnp.max(jnp.abs(out - ref)))

    print("KERNEL_OK")
</pallas_src>

<mosaic_0001>
module attributes {stable_mosaic.version = 11 : i64} {
  func.func @_conv1x1_hardswish_kernel(%arg0: memref<6x324xf32, #tpu.memory_space<vmem>>, %arg1: memref<8x4xf32, #tpu.memory_space<vmem>>, %arg2: memref<16x324xf32, #tpu.memory_space<vmem>>) attributes {dimension_semantics = [], scalar_prefetch = 0 : i64, scratch_operands = 0 : i64, tpu.core_type = #tpu.core_type<tc>} {
    %c0 = arith.constant 0 : index
    %c0_0 = arith.constant 0 : index
    %0 = vector.load %arg0[%c0, %c0_0] : memref<6x324xf32, #tpu.memory_space<vmem>>, vector<6x324xf32>
    %c0_1 = arith.constant 0 : index
    %c0_2 = arith.constant 0 : index
    %1 = vector.load %arg1[%c0_1, %c0_2] : memref<8x4xf32, #tpu.memory_space<vmem>>, vector<8x4xf32>
    %2 = vector.extract_strided_slice %1 {offsets = [0, 3], sizes = [8, 1], strides = [1, 1]} : vector<8x4xf32> to vector<8x1xf32>
    %3 = vector.shape_cast %2 : vector<8x1xf32> to vector<8x1xf32>
    %4 = vector.broadcast %3 : vector<8x1xf32> to vector<8x324xf32>
    %5 = vector.extract_strided_slice %1 {offsets = [0, 0], sizes = [8, 1], strides = [1, 1]} : vector<8x4xf32> to vector<8x1xf32>
    %6 = vector.extract_strided_slice %0 {offsets = [0, 0], sizes = [1, 324], strides = [1, 1]} : vector<6x324xf32> to vector<1x324xf32>
    %7 = vector.broadcast %5 : vector<8x1xf32> to vector<8x324xf32>
    %8 = vector.broadcast %6 : vector<1x324xf32> to vector<8x324xf32>
    %9 = arith.mulf %7, %8 : vector<8x324xf32>
    %10 = arith.addf %4, %9 : vector<8x324xf32>
    %11 = vector.extract_strided_slice %1 {offsets = [0, 1], sizes = [8, 1], strides = [1, 1]} : vector<8x4xf32> to vector<8x1xf32>
    %12 = vector.extract_strided_slice %0 {offsets = [1, 0], sizes = [1, 324], strides = [1, 1]} : vector<6x324xf32> to vector<1x324xf32>
    %13 = vector.broadcast %11 : vector<8x1xf32> to vector<8x324xf32>
    %14 = vector.broadcast %12 : vector<1x324xf32> to vector<8x324xf32>
    %15 = arith.mulf %13, %14 : vector<8x324xf32>
    %16 = arith.addf %10, %15 : vector<8x324xf32>
    %17 = vector.extract_strided_slice %1 {offsets = [0, 2], sizes = [8, 1], strides = [1, 1]} : vector<8x4xf32> to vector<8x1xf32>
    %18 = vector.extract_strided_slice %0 {offsets = [2, 0], sizes = [1, 324], strides = [1, 1]} : vector<6x324xf32> to vector<1x324xf32>
    %19 = vector.broadcast %17 : vector<8x1xf32> to vector<8x324xf32>
    %20 = vector.broadcast %18 : vector<1x324xf32> to vector<8x324xf32>
    %21 = arith.mulf %19, %20 : vector<8x324xf32>
    %22 = arith.addf %16, %21 : vector<8x324xf32>
    %cst = arith.constant 3.000000e+00 : f32
    %23 = vector.broadcast %cst : f32 to vector<8x324xf32>
    %24 = arith.addf %22, %23 : vector<8x324xf32>
    %cst_3 = arith.constant 0.000000e+00 : f32
    %cst_4 = arith.constant 6.000000e+00 : f32
    %25 = vector.broadcast %cst_3 : f32 to vector<8x324xf32>
    %26 = arith.maximumf %25, %24 : vector<8x324xf32>
    %27 = vector.broadcast %cst_4 : f32 to vector<8x324xf32>
    %28 = arith.minimumf %27, %26 : vector<8x324xf32>
    %29 = arith.mulf %22, %28 : vector<8x324xf32>
    %cst_5 = arith.constant 0.166666672 : f32
    %30 = vector.broadcast %cst_5 : f32 to vector<8x324xf32>
    %31 = arith.mulf %29, %30 : vector<8x324xf32>
    %c0_6 = arith.constant 0 : index
    %c0_7 = arith.constant 0 : index
    %32 = vector.load %arg2[%c0_6, %c0_7] : memref<16x324xf32, #tpu.memory_space<vmem>>, vector<8x324xf32>
    tpu.vector_store %arg2[%c0_6, %c0_7], %31 {strides = array<i32>} : memref<16x324xf32, #tpu.memory_space<vmem>>, vector<8x324xf32>,
    %33 = vector.extract_strided_slice %1 {offsets = [0, 3], sizes = [8, 1], strides = [1, 1]} : vector<8x4xf32> to vector<8x1xf32>
    %34 = vector.shape_cast %33 : vector<8x1xf32> to vector<8x1xf32>
    %35 = vector.broadcast %34 : vector<8x1xf32> to vector<8x324xf32>
    %36 = vector.extract_strided_slice %1 {offsets = [0, 0], sizes = [8, 1], strides = [1, 1]} : vector<8x4xf32> to vector<8x1xf32>
    %37 = vector.extract_strided_slice %0 {offsets = [3, 0], sizes = [1, 324], strides = [1, 1]} : vector<6x324xf32> to vector<1x324xf32>
    %38 = vector.broadcast %36 : vector<8x1xf32> to vector<8x324xf32>
    %39 = vector.broadcast %37 : vector<1x324xf32> to vector<8x324xf32>
    %40 = arith.mulf %38, %39 : vector<8x324xf32>
    %41 = arith.addf %35, %40 : vector<8x324xf32>
    %42 = vector.extract_strided_slice %1 {offsets = [0, 1], sizes = [8, 1], strides = [1, 1]} : vector<8x4xf32> to vector<8x1xf32>
    %43 = vector.extract_strided_slice %0 {offsets = [4, 0], sizes = [1, 324], strides = [1, 1]} : vector<6x324xf32> to vector<1x324xf32>
    %44 = vector.broadcast %42 : vector<8x1xf32> to vector<8x324xf32>
    %45 = vector.broadcast %43 : vector<1x324xf32> to vector<8x324xf32>
    %46 = arith.mulf %44, %45 : vector<8x324xf32>
    %47 = arith.addf %41, %46 : vector<8x324xf32>
    %48 = vector.extract_strided_slice %1 {offsets = [0, 2], sizes = [8, 1], strides = [1, 1]} : vector<8x4xf32> to vector<8x1xf32>
    %49 = vector.extract_strided_slice %0 {offsets = [5, 0], sizes = [1, 324], strides = [1, 1]} : vector<6x324xf32> to vector<1x324xf32>
    %50 = vector.broadcast %48 : vector<8x1xf32> to vector<8x324xf32>
    %51 = vector.broadcast %49 : vector<1x324xf32> to vector<8x324xf32>
    %52 = arith.mulf %50, %51 : vector<8x324xf32>
    %53 = arith.addf %47, %52 : vector<8x324xf32>
    %cst_8 = arith.constant 3.000000e+00 : f32
    %54 = vector.broadcast %cst_8 : f32 to vector<8x324xf32>
    %55 = arith.addf %53, %54 : vector<8x324xf32>
    %cst_9 = arith.constant 0.000000e+00 : f32
    %cst_10 = arith.constant 6.000000e+00 : f32
    %56 = vector.broadcast %cst_9 : f32 to vector<8x324xf32>
    %57 = arith.maximumf %56, %55 : vector<8x324xf32>
    %58 = vector.broadcast %cst_10 : f32 to vector<8x324xf32>
    %59 = arith.minimumf %58, %57 : vector<8x324xf32>
    %60 = arith.mulf %53, %59 : vector<8x324xf32>
    %cst_11 = arith.constant 0.166666672 : f32
    %61 = vector.broadcast %cst_11 : f32 to vector<8x324xf32>
    %62 = arith.mulf %60, %61 : vector<8x324xf32>
    %c8 = arith.constant 8 : index
    %c0_12 = arith.constant 0 : index
    %63 = vector.load %arg2[%c8, %c0_12] : memref<16x324xf32, #tpu.memory_space<vmem>>, vector<8x324xf32>
    tpu.vector_store %arg2[%c8, %c0_12], %62 {strides = array<i32>} : memref<16x324xf32, #tpu.memory_space<vmem>>, vector<8x324xf32>,
    return
  }
}

</mosaic_0001>

<llo_original>
// kernel: conv1x1_pad1_hardswish.2
$region0: #{conv1x1_pad1_hardswish.2}
  #allocation0 [shape = 'u32[]', space=smem, size = 0x4, offset = 0x4, fixed_abs, tag = 'smem constant byte address 0x4 - core index']
  #allocation1 [shape = 'u32[144,128]{1,0:T(1,128)}', space=vmem, size = 0x12000, scoped, tag = 'internal scratch']
  #allocation2 [shape = 'u32[2048]{0}', space=vmem, size = 0x2000, scoped, tag = 'scoped memory for conv1x1_pad1_hardswish.2']
  #allocation3 [shape = 'u32[2048]{0}', space=vmem, size = 0x2000, scoped, tag = 'scoped memory for conv1x1_pad1_hardswish.2']
  #allocation4 [shape = 'u32[2048]{0}', space=vmem, size = 0x2000, scoped, tag = 'scoped memory for conv1x1_pad1_hardswish.2']
  #allocation5 [shape = 'u32[2048]{0}', space=vmem, size = 0x2000, scoped, tag = 'scoped memory for conv1x1_pad1_hardswish.2']
  #allocation6 [shape = 'u32[2048]{0}', space=vmem, size = 0x2000, scoped, tag = 'scoped memory for conv1x1_pad1_hardswish.2']
  #allocation7 [shape = 'u32[2048]{0}', space=vmem, size = 0x2000, scoped, tag = 'scoped memory for conv1x1_pad1_hardswish.2']
  #allocation8 [shape = 'u32[2048]{0}', space=vmem, size = 0x2000, scoped, tag = 'scoped memory for conv1x1_pad1_hardswish.2']
  #allocation9 [shape = 'u32[2048]{0}', space=vmem, size = 0x2000, scoped, tag = 'scoped memory for conv1x1_pad1_hardswish.2']
  #allocation10 [shape = 'u32[2048]{0}', space=vmem, size = 0x2000, scoped, tag = 'scoped memory for conv1x1_pad1_hardswish.2']
  #allocation11 [shape = 'u32[2048]{0}', space=vmem, size = 0x2000, scoped, tag = 'scoped memory for conv1x1_pad1_hardswish.2']
  %s0 = inlined_call_operand.vmem [shape: f32[6,324], index: 0, kind: input, shape index: {}]
  %s1 = inlined_call_operand.vmem [shape: f32[8,1], index: 1, kind: input, shape index: {}]
  %s2 = inlined_call_operand.<no memory space> [shape: f32[], index: 2, kind: input, shape index: {}]
  %s3 = inlined_call_operand.vmem [shape: f32[8,3], index: 3, kind: input, shape index: {}]
  %s4 = inlined_call_operand.vmem [shape: f32[16,324], index: 4, kind: output, shape index: {}]
  %s5 = sld [smem:[#allocation0]]
  $region22: #{conv1x1_pad1_hardswish.2} parent=0
    _
  %s7 = ssub.s32 1, %s5
  %s8 = scalar_select 0, %s7, %s5
  %v9 = vstv %s2
  %v10 = vstv %s2
  $region1: #{conv1x1_pad1_hardswish.2} parent=0
    #allocation12 [shape = 'u8[4096]{0}', space=vmem, size = 0x1000, dematerialized = true, scoped, tag = 'FusionAdapter Buffer %fusion.1 = f32[8,4]{1,0:T(8,128)} fusion(%param_1.6, %param_2.3, %param_3.1), kind=kLoop, calls=%fused_computation.1.clone, metadata={op_name="jit(conv1x1_pad1_hardswish)/concatenate" stack_frame_id=11}']
    // Predicated region
    $region2: #{conv1x1_pad1_hardswish.2} parent=1 // pred_check
      _
    $region3: #{conv1x1_pad1_hardswish.2} parent=1 // pred_check_branch
      %12 = sbr.rel (0) target = $region5
    $region4: #{conv1x1_pad1_hardswish.2} parent=1 // pred_region
      _
    $region5: #{conv1x1_pad1_hardswish.2} parent=1 // pred_fallthru
      _
    // Predicated region
    $region6: #{conv1x1_pad1_hardswish.2} parent=1 // pred_check
      _
    $region7: #{conv1x1_pad1_hardswish.2} parent=1 // pred_check_branch
      %14 = sbr.rel (0) target = $region9
    $region8: #{conv1x1_pad1_hardswish.2} parent=1 // pred_region
      %s16 = ssub.s32 1, 0
      %s17 = smul.u32 128, %s16
      %p18 = scmp.lt.s32.totalorder 0, 0
      %s19 = scalar_select %p18, 0, 0
      %s20 = smul.addr %s19, 8
      %s21 = scalar_lea.vmem %s1, %s20
      %s23 = ssub.s32 1, 0
      %s24 = smul.u32 128, %s23
    $region9: #{conv1x1_pad1_hardswish.2} parent=1 // pred_fallthru
      _
    // Predicated region
    $region10: #{conv1x1_pad1_hardswish.2} parent=1 // pred_check
      _
    $region11: #{conv1x1_pad1_hardswish.2} parent=1 // pred_check_branch
      %26 = sbr.rel (0) target = $region13
    $region12: #{conv1x1_pad1_hardswish.2} parent=1 // pred_region
      _
    $region13: #{conv1x1_pad1_hardswish.2} parent=1 // pred_fallthru
      _
    %s28 = ssub.s32 1, 0
    %s29 = smul.u32 128, %s28
    %p30 = scmp.lt.s32.totalorder 0, 0
    %s31 = scalar_select %p30, 0, 0
    %s32 = smul.addr %s31, 8
    %s33 = scalar_lea.vmem %s1, %s32
    %s35 = ssub.s32 1, 0
    %s36 = smul.u32 128, %s35
    %p37 = scmp.lt.s32.totalorder 0, 0
    %s38 = scalar_select %p37, 0, 0
    %s39 = smul.addr %s38, 8
    %s40 = scalar_lea.vmem %s1, %s39
    %s42 = ssub.s32 1, 0
    %s43 = smul.u32 128, %s42
    %s44 = ssub.s32 0, 0
    %p45 = scmp.lt.s32.totalorder %s44, 0
    %s46 = scalar_select %p45, 0, 255
    %v47 = vld [vmem:[%s40] sm:%s46]
    %v48 = vlaneseq
    %v49 = vand.u32 %v48, 127
    %v50 = vadd.s32 %v49, 128
    %vm51 = vcmp.lt.s32.totalorder %v50, 129
    %v52 = vsel %vm51, %v47, %v9
    %v53 = vlaneseq
    %v54 = vand.u32 %v53, 127
    %vm55 = vcmp.lt.s32.totalorder %v54, 125
    %v56 = vsel %vm55, %v52, %v9
    %57 = vrot.lane.b32.xlu0 %v56, 3
    %v58 = vpop.permute.xlu0 %57
    %v59 = vld [vmem:[%s3] sm:$0xff]
    %v60 = vlaneseq
    %v61 = vand.u32 %v60, 127
    %vm63 = vcmp.lt.s32.totalorder %v61, 3
    %v64 = vsel %vm63, %v59, %v10
    %65 = xla_tuple %v64, %v58
    %66 = xla_tuple %65
    %v67 = vmax.f32 %v64, %v58
    %68 = xla_tuple %v67
    %70 = vst [vmem:[#allocation12] sm:$0xff] %v67
    %v71 = vld [vmem:[%s0] sm:$0x3f]
    %v72 = vld [vmem:[%s0 + $0x8] sm:$0x3f]
    %v73 = vld [vmem:[%s0 + $0x10] sm:$0x3f]
    %v74 = vld [vmem:[#allocation12] sm:$0xff]
    %76 = vset.pattern.permute.xlu0 3
    %77 = vperm.xlu0 %76, %v74
    %v78 = vpop.permute.xlu0 %77
    %80 = vset.pattern.permute.xlu0 0
    %81 = vperm.xlu0 %80, %v74
    %v82 = vpop.permute.xlu0 %81
    %v84 = vlaneseq
    %v85 = vshrl.u32 %v84, 7
    %v86 = vsub.s32 0, %v85
    %v87 = vrot.slane %v71, %v86
    %v88 = vlaneseq
    %v89 = vshrl.u32 %v88, 7
    %v90 = vsub.s32 0, %v89
    %v91 = vrot.slane %v72, %v90
    %v92 = vlaneseq
    %v93 = vshrl.u32 %v92, 7
    %v94 = vsub.s32 0, %v93
    %v95 = vrot.slane %v73, %v94
    %v96 = vmul.f32 %v82, %v87
    %v97 = vmul.f32 %v82, %v91
    %v98 = vmul.f32 %v82, %v95
    %v99 = vadd.f32 %v78, %v96
    %v100 = vadd.f32 %v78, %v97
    %v101 = vadd.f32 %v78, %v98
    %102 = vset.pattern.permute.xlu0 1
    %103 = vperm.xlu0 %102, %v74
    %v104 = vpop.permute.xlu0 %103
    %v106 = vlaneseq
    %v107 = vshrl.u32 %v106, 7
    %v108 = vsub.s32 1, %v107
    %v109 = vrot.slane %v71, %v108
    %v110 = vlaneseq
    %v111 = vshrl.u32 %v110, 7
    %v112 = vsub.s32 1, %v111
    %v113 = vrot.slane %v72, %v112
    %v114 = vlaneseq
    %v115 = vshrl.u32 %v114, 7
    %v116 = vsub.s32 1, %v115
    %v117 = vrot.slane %v73, %v116
    %v118 = vmul.f32 %v104, %v109
    %v119 = vmul.f32 %v104, %v113
    %v120 = vmul.f32 %v104, %v117
    %v121 = vadd.f32 %v99, %v118
    %v122 = vadd.f32 %v100, %v119
    %v123 = vadd.f32 %v101, %v120
    %124 = vset.pattern.permute.xlu0 2
    %125 = vperm.xlu0 %124, %v74
    %v126 = vpop.permute.xlu0 %125
    %v128 = vlaneseq
    %v129 = vshrl.u32 %v128, 7
    %v130 = vsub.s32 2, %v129
    %v131 = vrot.slane %v71, %v130
    %v132 = vlaneseq
    %v133 = vshrl.u32 %v132, 7
    %v134 = vsub.s32 2, %v133
    %v135 = vrot.slane %v72, %v134
    %v136 = vlaneseq
    %v137 = vshrl.u32 %v136, 7
    %v138 = vsub.s32 2, %v137
    %v139 = vrot.slane %v73, %v138
    %v140 = vmul.f32 %v126, %v131
    %v141 = vmul.f32 %v126, %v135
    %v142 = vmul.f32 %v126, %v139
    %v143 = vadd.f32 %v121, %v140
    %v144 = vadd.f32 %v122, %v141
    %v145 = vadd.f32 %v123, %v142
    %v146 = vadd.f32 %v143, 3.0
    %v147 = vadd.f32 %v144, 3.0
    %v148 = vadd.f32 %v145, 3.0
    %v149 = vmax.f32 %v146, 0.0
    %v150 = vmax.f32 %v147, 0.0
    %v151 = vmax.f32 %v148, 0.0
    %v152 = vmin.f32 %v149, 6.0
    %v153 = vmin.f32 %v150, 6.0
    %v154 = vmin.f32 %v151, 6.0
    %v155 = vmul.f32 %v143, %v152
    %v156 = vmul.f32 %v144, %v153
    %v157 = vmul.f32 %v145, %v154
    %v158 = vmul.f32 %v155, 0.16666667
    %v159 = vmul.f32 %v156, 0.16666667
    %v160 = vmul.f32 %v157, 0.16666667
    %161 = vst [vmem:[%s4] sm:$0xff] %v158
    %162 = vst [vmem:[%s4 + $0x8] sm:$0xff] %v159
    %vm163 = vcmask 556032
    %164 = vst.msk [vmem:[%s4 + $0x10] sm:$0xff] %vm163, %v160
    %v165 = vlaneseq
    %v166 = vshrl.u32 %v165, 7
    %v167 = vsub.s32 3, %v166
    %v168 = vrot.slane %v71, %v167
    %v169 = vlaneseq
    %v170 = vshrl.u32 %v169, 7
    %v171 = vsub.s32 3, %v170
    %v172 = vrot.slane %v72, %v171
    %v173 = vlaneseq
    %v174 = vshrl.u32 %v173, 7
    %v175 = vsub.s32 3, %v174
    %v176 = vrot.slane %v73, %v175
    %v177 = vmul.f32 %v82, %v168
    %v178 = vmul.f32 %v82, %v172
    %v179 = vmul.f32 %v82, %v176
    %v180 = vadd.f32 %v78, %v177
    %v181 = vadd.f32 %v78, %v178
    %v182 = vadd.f32 %v78, %v179
    %v183 = vlaneseq
    %v184 = vshrl.u32 %v183, 7
    %v185 = vsub.s32 4, %v184
    %v186 = vrot.slane %v71, %v185
    %v187 = vlaneseq
    %v188 = vshrl.u32 %v187, 7
    %v189 = vsub.s32 4, %v188
    %v190 = vrot.slane %v72, %v189
    %v191 = vlaneseq
    %v192 = vshrl.u32 %v191, 7
    %v193 = vsub.s32 4, %v192
    %v194 = vrot.slane %v73, %v193
    %v195 = vmul.f32 %v104, %v186
    %v196 = vmul.f32 %v104, %v190
    %v197 = vmul.f32 %v104, %v194
    %v198 = vadd.f32 %v180, %v195
    %v199 = vadd.f32 %v181, %v196
    %v200 = vadd.f32 %v182, %v197
    %v201 = vlaneseq
    %v202 = vshrl.u32 %v201, 7
    %v203 = vsub.s32 5, %v202
    %v204 = vrot.slane %v71, %v203
    %v205 = vlaneseq
    %v206 = vshrl.u32 %v205, 7
    %v207 = vsub.s32 5, %v206
    %v208 = vrot.slane %v72, %v207
    %v209 = vlaneseq
    %v210 = vshrl.u32 %v209, 7
    %v211 = vsub.s32 5, %v210
    %v212 = vrot.slane %v73, %v211
    %v213 = vmul.f32 %v126, %v204
    %v214 = vmul.f32 %v126, %v208
    %v215 = vmul.f32 %v126, %v212
    %v216 = vadd.f32 %v198, %v213
    %v217 = vadd.f32 %v199, %v214
    %v218 = vadd.f32 %v200, %v215
    %v219 = vadd.f32 %v216, 3.0
    %v220 = vadd.f32 %v217, 3.0
    %v221 = vadd.f32 %v218, 3.0
    %v222 = vmax.f32 %v219, 0.0
    %v223 = vmax.f32 %v220, 0.0
    %v224 = vmax.f32 %v221, 0.0
    %v225 = vmin.f32 %v222, 6.0
    %v226 = vmin.f32 %v223, 6.0
    %v227 = vmin.f32 %v224, 6.0
    %v228 = vmul.f32 %v216, %v225
    %v229 = vmul.f32 %v217, %v226
    %v230 = vmul.f32 %v218, %v227
    %v231 = vmul.f32 %v228, 0.16666667
    %v232 = vmul.f32 %v229, 0.16666667
    %v233 = vmul.f32 %v230, 0.16666667
    %234 = vst [vmem:[%s4 + $0x18] sm:$0xff] %v231
    %235 = vst [vmem:[%s4 + $0x20] sm:$0xff] %v232
    %236 = vst.msk [vmem:[%s4 + $0x28] sm:$0xff] %vm163, %v233
    // Predicated region
    $region14: #{conv1x1_pad1_hardswish.2} parent=1 // pred_check
      _
    $region15: #{conv1x1_pad1_hardswish.2} parent=1 // pred_check_branch
      %238 = sbr.rel (0) target = $region17
    $region16: #{conv1x1_pad1_hardswish.2} parent=1 // pred_region
      _
    $region17: #{conv1x1_pad1_hardswish.2} parent=1 // pred_fallthru
      _
    // Predicated region
    $region18: #{conv1x1_pad1_hardswish.2} parent=1 // pred_check
      _
    $region19: #{conv1x1_pad1_hardswish.2} parent=1 // pred_check_branch
      %240 = sbr.rel (0) target = $region21
    $region20: #{conv1x1_pad1_hardswish.2} parent=1 // pred_region
      _
    $region21: #{conv1x1_pad1_hardswish.2} parent=1 // pred_fallthru
      _

</llo_original>
